<compile_context>
chip_gen: v7x
topology: tpu7x:2x2x1
jax: 0.10.0
libtpu: 0.0.40
codegen_flags: <defaults>
</compile_context>

<pallas_src>
import functools

import jax
import jax.numpy as jnp
from jax import lax
from jax.experimental import pallas as pl
from jax.experimental.pallas import tpu as pltpu


def _round_up(x, m):
    return ((x + m - 1) // m) * m


def gru_kernel(gi_ref, h0_ref, whh_ref, bhn_ref, out_ref, hn_ref, *, seq_len, chunk):
    """One grid step = `chunk` GRU timesteps.

    gi_ref : (chunk, Bp, 3*Hp) precomputed x @ W_ih^T with b_ih and the r/z parts
                               of b_hh already folded in (gate order r, z, n).
    h0_ref : (Bp, Hp)          initial hidden state.
    whh_ref: (Hp, 3*Hp)        recurrent weight, transposed + gate-blocked + padded.
    bhn_ref: (1, Hp)           b_hh of the n-gate (must stay inside the r*(...) term).
    out_ref: (chunk, Bp, Hp)   per-step hidden states for this chunk.
    hn_ref : (Bp, Hp)          resident accumulator (constant index_map) = running h.
    """
    c = pl.program_id(0)
    Hp = h0_ref.shape[-1]

    @pl.when(c == 0)
    def _():
        hn_ref[...] = h0_ref[...]

    whh = whh_ref[...]
    bhn = bhn_ref[...]

    # Number of real (non-padded) timesteps in this chunk.
    steps = jnp.minimum(chunk, seq_len - c * chunk)

    def step(t, h):
        gi = gi_ref[t]                                                   # (Bp, 3*Hp)
        gh = jnp.dot(h, whh, preferred_element_type=jnp.float32)         # (Bp, 3*Hp)
        r = jax.nn.sigmoid(gi[:, 0:Hp] + gh[:, 0:Hp])
        z = jax.nn.sigmoid(gi[:, Hp:2 * Hp] + gh[:, Hp:2 * Hp])
        n = jnp.tanh(gi[:, 2 * Hp:] + r * (gh[:, 2 * Hp:] + bhn))
        h_new = (1.0 - z) * n + z * h
        out_ref[t] = h_new.astype(out_ref.dtype)
        return h_new

    hn_ref[...] = lax.fori_loop(0, steps, step, hn_ref[...])


def encoder_rnn_forward(tokens, hidden, params, *, seq_chunk=128):
    """tokens: (B, S) int32; hidden: (1, B, H) f32 -> (output (B,S,H), hidden (1,B,H))."""
    emb_tbl = params["embedding"]      # (V, H)
    w_ih = params["w_ih"]              # (3H, H)  PyTorch layout, gate order r, z, n
    w_hh = params["w_hh"]              # (3H, H)
    b_ih = params["b_ih"]              # (3H,)
    b_hh = params["b_hh"]              # (3H,)

    B, S = tokens.shape
    H = emb_tbl.shape[1]

    # TPU-friendly padded sizes: lanes (last dim) -> 128, sublanes (batch) -> 8.
    Hp = _round_up(H, 128)
    Bp = _round_up(B, 8)
    chunk = min(S, seq_chunk)
    Sp = pl.cdiv(S, chunk) * chunk

    # Embedding gather; transpose folded into the gather -> time-major (S, B, H).
    x_seq = jnp.take(emb_tbl, tokens.T, axis=0)                          # (S, B, H)

    # --- Hoisted input projection: one big matmul over all timesteps ---------------
    # Fold b_ih fully, and the r/z parts of b_hh (the n part must remain inside the
    # r * (...) term so it is handed to the kernel separately).
    bias_fold = b_ih + jnp.concatenate(
        [b_hh[0:H], b_hh[H:2 * H], jnp.zeros((H,), b_hh.dtype)])
    gi_seq = jnp.einsum("sbh,gh->sbg", x_seq, w_ih,
                        preferred_element_type=jnp.float32) + bias_fold  # (S, B, 3H)

    # Pad per-gate so each gate block is Hp wide (lane-aligned slices in the kernel).
    gi3 = gi_seq.reshape(S, B, 3, H)
    gi3 = jnp.pad(gi3, ((0, Sp - S), (0, Bp - B), (0, 0), (0, Hp - H)))
    gi_p = gi3.reshape(Sp, Bp, 3 * Hp)

    # Recurrent weight: (3H, H) -> transposed, per-gate zero-padded, gate-blocked.
    w_hh3_t = jnp.transpose(w_hh.reshape(3, H, H), (0, 2, 1))            # (3, Hin, Hout)
    w_hh3_t = jnp.pad(w_hh3_t, ((0, 0), (0, Hp - H), (0, Hp - H)))
    whh_p = jnp.transpose(w_hh3_t, (1, 0, 2)).reshape(Hp, 3 * Hp)        # (Hp, 3*Hp)

    bhn_p = jnp.pad(b_hh[2 * H:], (0, Hp - H))[None, :]                  # (1, Hp)

    h0_p = jnp.pad(hidden[0], ((0, Bp - B), (0, Hp - H)))                # (Bp, Hp)

    grid = (Sp // chunk,)
    kernel = functools.partial(gru_kernel, seq_len=S, chunk=chunk)

    out_p, hn_p = pl.pallas_call(
        kernel,
        out_shape=(
            jax.ShapeDtypeStruct((Sp, Bp, Hp), jnp.float32),
            jax.ShapeDtypeStruct((Bp, Hp), jnp.float32),
        ),
        grid_spec=pltpu.PrefetchScalarGridSpec(
            num_scalar_prefetch=0,
            grid=grid,
            in_specs=[
                pl.BlockSpec((chunk, Bp, 3 * Hp), lambda c: (c, 0, 0)),  # gi chunk
                pl.BlockSpec((Bp, Hp), lambda c: (0, 0)),                # h0
                pl.BlockSpec((Hp, 3 * Hp), lambda c: (0, 0)),            # W_hh^T
                pl.BlockSpec((1, Hp), lambda c: (0, 0)),                 # b_hh (n gate)
            ],
            out_specs=[
                pl.BlockSpec((chunk, Bp, Hp), lambda c: (c, 0, 0)),      # out chunk
                pl.BlockSpec((Bp, Hp), lambda c: (0, 0)),                # final hidden
            ],
        ),
        compiler_params=pltpu.CompilerParams(
            dimension_semantics=("arbitrary",),  # recurrence: sequential over time chunks
        ),
    )(gi_p, h0_p, whh_p, bhn_p)

    output = jnp.transpose(out_p[:S, :B, :H], (1, 0, 2))   # (B, S, H), batch_first
    hidden_out = hn_p[:B, :H][None]                        # (1, B, H)
    return output, hidden_out


def init_params(key, input_size, hidden_size, padding_idx):
    k_emb, k_wih, k_whh, k_bih, k_bhh = jax.random.split(key, 5)
    H = hidden_size
    bound = 1.0 / jnp.sqrt(H)

    emb = jax.random.normal(k_emb, (input_size, H), dtype=jnp.float32)
    emb = emb.at[padding_idx].set(0.0)  # nn.Embedding padding_idx row is zero

    # PyTorch layout: weight_ih_l0 / weight_hh_l0 are (3H, H), gate order r, z, n.
    w_ih = jax.random.uniform(k_wih, (3 * H, H), minval=-bound, maxval=bound, dtype=jnp.float32)
    w_hh = jax.random.uniform(k_whh, (3 * H, H), minval=-bound, maxval=bound, dtype=jnp.float32)
    b_ih = jax.random.uniform(k_bih, (3 * H,), minval=-bound, maxval=bound, dtype=jnp.float32)
    b_hh = jax.random.uniform(k_bhh, (3 * H,), minval=-bound, maxval=bound, dtype=jnp.float32)

    return {"embedding": emb, "w_ih": w_ih, "w_hh": w_hh, "b_ih": b_ih, "b_hh": b_hh}


def gru_reference(tokens, hidden, params):
    """Pure-JAX reference matching torch.nn.GRU(batch_first=True) semantics."""
    emb = jnp.take(params["embedding"], tokens, axis=0)   # (B, S, H)
    H = emb.shape[-1]
    w_ih, w_hh = params["w_ih"], params["w_hh"]
    b_ih, b_hh = params["b_ih"], params["b_hh"]

    def step(h, x):
        gi = x @ w_ih.T + b_ih
        gh = h @ w_hh.T + b_hh
        r = jax.nn.sigmoid(gi[:, 0:H] + gh[:, 0:H])
        z = jax.nn.sigmoid(gi[:, H:2 * H] + gh[:, H:2 * H])
        n = jnp.tanh(gi[:, 2 * H:] + r * gh[:, 2 * H:])
        h_new = (1.0 - z) * n + z * h
        return h_new, h_new

    h_last, outs = lax.scan(step, hidden[0], jnp.transpose(emb, (1, 0, 2)))
    return jnp.transpose(outs, (1, 0, 2)), h_last[None]


if __name__ == "__main__":
    VOCAB = 16        # input_size
    HIDDEN = 32       # hidden_size
    PAD = 0           # padding_idx
    B, S = 2, 8

    key = jax.random.PRNGKey(0)
    k_params, k_tok = jax.random.split(key)

    params = init_params(k_params, VOCAB, HIDDEN, PAD)
    tokens = jax.random.randint(k_tok, (B, S), 0, VOCAB, dtype=jnp.int32)
    hidden0 = jnp.zeros((1, B, HIDDEN), dtype=jnp.float32)  # init_hidden()

    forward = jax.jit(encoder_rnn_forward)
    output, hidden_n = forward(tokens, hidden0, params)
    output = jax.block_until_ready(output)
    hidden_n = jax.block_until_ready(hidden_n)

    # sanity check against pure-JAX reference
    ref_out, ref_hid = gru_reference(tokens, hidden0, params)
    assert output.shape == (B, S, HIDDEN)
    assert hidden_n.shape == (1, B, HIDDEN)
    assert jnp.allclose(output, ref_out, atol=1e-5, rtol=1e-5)
    assert jnp.allclose(hidden_n, ref_hid, atol=1e-5, rtol=1e-5)

    print("KERNEL_OK")
</pallas_src>

<mosaic_0001>
module attributes {stable_mosaic.version = 11 : i64} {
  func.func @gru_kernel(%arg0: i32, %arg1: memref<8x8x384xf32, #tpu.memory_space<vmem>>, %arg2: memref<8x128xf32, #tpu.memory_space<vmem>>, %arg3: memref<128x384xf32, #tpu.memory_space<vmem>>, %arg4: memref<1x128xf32, #tpu.memory_space<vmem>>, %arg5: memref<8x8x128xf32, #tpu.memory_space<vmem>>, %arg6: memref<8x128xf32, #tpu.memory_space<vmem>>) attributes {dimension_semantics = [#tpu.dimension_semantics<arbitrary>], iteration_bounds = array<i64: 1>, scalar_prefetch = 0 : i64, scratch_operands = 0 : i64, tpu.core_type = #tpu.core_type<tc>, window_params = [{transform_indices = @transform_0, window_bounds = array<i64: 8, 8, 384>}, {pipeline_mode = #tpu.pipeline_mode<synchronous>, transform_indices = @transform_1, window_bounds = array<i64: 8, 128>}, {pipeline_mode = #tpu.pipeline_mode<synchronous>, transform_indices = @transform_2, window_bounds = array<i64: 128, 384>}, {pipeline_mode = #tpu.pipeline_mode<synchronous>, transform_indices = @transform_3, window_bounds = array<i64: 1, 128>}, {transform_indices = @transform_4, window_bounds = array<i64: 8, 8, 128>}, {pipeline_mode = #tpu.pipeline_mode<synchronous>, transform_indices = @transform_5, window_bounds = array<i64: 8, 128>}]} {
    %c0_i32 = arith.constant 0 : i32
    %0 = arith.cmpi eq, %arg0, %c0_i32 : i32
    %1 = arith.extui %0 : i1 to i32
    %c0_i32_0 = arith.constant 0 : i32
    %2 = arith.cmpi ne, %1, %c0_i32_0 : i32
    scf.if %2 {
      %c0_11 = arith.constant 0 : index
      %c0_12 = arith.constant 0 : index
      %13 = vector.load %arg2[%c0_11, %c0_12] : memref<8x128xf32, #tpu.memory_space<vmem>>, vector<8x128xf32>
      %c0_13 = arith.constant 0 : index
      %c0_14 = arith.constant 0 : index
      %14 = vector.load %arg6[%c0_13, %c0_14] : memref<8x128xf32, #tpu.memory_space<vmem>>, vector<8x128xf32>
      tpu.vector_store %arg6[%c0_13, %c0_14], %13 {strides = array<i32>} : memref<8x128xf32, #tpu.memory_space<vmem>>, vector<8x128xf32>,
    } else {
    }
    %c0 = arith.constant 0 : index
    %c0_1 = arith.constant 0 : index
    %3 = vector.load %arg3[%c0, %c0_1] : memref<128x384xf32, #tpu.memory_space<vmem>>, vector<128x384xf32>
    %c0_2 = arith.constant 0 : index
    %c0_3 = arith.constant 0 : index
    %4 = vector.load %arg4[%c0_2, %c0_3] : memref<1x128xf32, #tpu.memory_space<vmem>>, vector<1x128xf32>
    %c8_i32 = arith.constant 8 : i32
    %5 = arith.muli %arg0, %c8_i32 : i32
    %c8_i32_4 = arith.constant 8 : i32
    %6 = arith.subi %c8_i32_4, %5 : i32
    %c8_i32_5 = arith.constant 8 : i32
    %7 = arith.minsi %c8_i32_5, %6 : i32
    %c0_6 = arith.constant 0 : index
    %c0_7 = arith.constant 0 : index
    %8 = vector.load %arg6[%c0_6, %c0_7] : memref<8x128xf32, #tpu.memory_space<vmem>>, vector<8x128xf32>
    %c0_i32_8 = arith.constant 0 : i32
    %9 = arith.subi %7, %c0_i32_8 : i32
    %10 = arith.addi %c0_i32_8, %9 : i32
    %c1_i32 = arith.constant 1 : i32
    %11 = scf.for %arg7 = %c0_i32_8 to %10 step %c1_i32 iter_args(%arg8 = %8) -> (vector<8x128xf32>)  : i32 {
      %13 = arith.index_cast %arg7 : i32 to index
      %c0_11 = arith.constant 0 : index
      %c0_12 = arith.constant 0 : index
      %14 = vector.load %arg1[%13, %c0_11, %c0_12] : memref<8x8x384xf32, #tpu.memory_space<vmem>>, vector<1x8x384xf32>
      %15 = vector.shape_cast %14 : vector<1x8x384xf32> to vector<8x384xf32>
      %cst = arith.constant dense<0.000000e+00> : vector<8x384xf32>
      %16 = tpu.matmul %arg8, %3, %cst {dimension_numbers = #tpu.dot_dimension_numbers<[1], [0], [0], [1], [0, 0, 1, 1], [], []>} : vector<8x128xf32>, vector<128x384xf32>, vector<8x384xf32> -> vector<8x384xf32>
      %17 = vector.extract_strided_slice %15 {offsets = [0, 0], sizes = [8, 128], strides = [1, 1]} : vector<8x384xf32> to vector<8x128xf32>
      %18 = vector.extract_strided_slice %16 {offsets = [0, 0], sizes = [8, 128], strides = [1, 1]} : vector<8x384xf32> to vector<8x128xf32>
      %19 = arith.addf %17, %18 : vector<8x128xf32>
      %20 = arith.negf %19 : vector<8x128xf32>
      %21 = math.exp %20 : vector<8x128xf32>
      %cst_13 = arith.constant 1.000000e+00 : f32
      %22 = vector.broadcast %cst_13 : f32 to vector<8x128xf32>
      %23 = arith.addf %22, %21 : vector<8x128xf32>
      %24 = arith.divf %22, %23 : vector<8x128xf32>
      %25 = vector.extract_strided_slice %15 {offsets = [0, 128], sizes = [8, 128], strides = [1, 1]} : vector<8x384xf32> to vector<8x128xf32>
      %26 = vector.extract_strided_slice %16 {offsets = [0, 128], sizes = [8, 128], strides = [1, 1]} : vector<8x384xf32> to vector<8x128xf32>
      %27 = arith.addf %25, %26 : vector<8x128xf32>
      %28 = arith.negf %27 : vector<8x128xf32>
      %29 = math.exp %28 : vector<8x128xf32>
      %cst_14 = arith.constant 1.000000e+00 : f32
      %30 = vector.broadcast %cst_14 : f32 to vector<8x128xf32>
      %31 = arith.addf %30, %29 : vector<8x128xf32>
      %32 = arith.divf %30, %31 : vector<8x128xf32>
      %33 = vector.extract_strided_slice %15 {offsets = [0, 256], sizes = [8, 128], strides = [1, 1]} : vector<8x384xf32> to vector<8x128xf32>
      %34 = vector.extract_strided_slice %16 {offsets = [0, 256], sizes = [8, 128], strides = [1, 1]} : vector<8x384xf32> to vector<8x128xf32>
      %35 = vector.broadcast %4 : vector<1x128xf32> to vector<8x128xf32>
      %36 = arith.addf %34, %35 : vector<8x128xf32>
      %37 = arith.mulf %24, %36 : vector<8x128xf32>
      %38 = arith.addf %33, %37 : vector<8x128xf32>
      %39 = math.tanh %38 : vector<8x128xf32>
      %cst_15 = arith.constant 1.000000e+00 : f32
      %40 = vector.broadcast %cst_15 : f32 to vector<8x128xf32>
      %41 = arith.subf %40, %32 : vector<8x128xf32>
      %42 = arith.mulf %41, %39 : vector<8x128xf32>
      %43 = arith.mulf %32, %arg8 : vector<8x128xf32>
      %44 = arith.addf %42, %43 : vector<8x128xf32>
      %45 = arith.index_cast %arg7 : i32 to index
      %c0_16 = arith.constant 0 : index
      %c0_17 = arith.constant 0 : index
      %46 = vector.load %arg5[%45, %c0_16, %c0_17] : memref<8x8x128xf32, #tpu.memory_space<vmem>>, vector<1x8x128xf32>
      %47 = vector.shape_cast %46 : vector<1x8x128xf32> to vector<8x128xf32>
      %48 = vector.shape_cast %44 : vector<8x128xf32> to vector<1x8x128xf32>
      tpu.vector_store %arg5[%45, %c0_16, %c0_17], %48 {strides = array<i32>} : memref<8x8x128xf32, #tpu.memory_space<vmem>>, vector<1x8x128xf32>,
      scf.yield %44 : vector<8x128xf32>
    }
    %c0_9 = arith.constant 0 : index
    %c0_10 = arith.constant 0 : index
    %12 = vector.load %arg6[%c0_9, %c0_10] : memref<8x128xf32, #tpu.memory_space<vmem>>, vector<8x128xf32>
    tpu.vector_store %arg6[%c0_9, %c0_10], %11 {strides = array<i32>} : memref<8x128xf32, #tpu.memory_space<vmem>>, vector<8x128xf32>,
    return
  }
  func.func @transform_0(%arg0: i32) -> (i32, i32, i32) {
    %c0_i32 = arith.constant 0 : i32
    %c0_i32_0 = arith.constant 0 : i32
    %c0_i32_1 = arith.constant 0 : i32
    return %arg0, %c0_i32, %c0_i32_0 : i32, i32, i32
  }
  func.func @transform_1(%arg0: i32) -> (i32, i32) {
    %c0_i32 = arith.constant 0 : i32
    %c0_i32_0 = arith.constant 0 : i32
    %c0_i32_1 = arith.constant 0 : i32
    return %c0_i32, %c0_i32_0 : i32, i32
  }
  func.func @transform_2(%arg0: i32) -> (i32, i32) {
    %c0_i32 = arith.constant 0 : i32
    %c0_i32_0 = arith.constant 0 : i32
    %c0_i32_1 = arith.constant 0 : i32
    return %c0_i32, %c0_i32_0 : i32, i32
  }
  func.func @transform_3(%arg0: i32) -> (i32, i32) {
    %c0_i32 = arith.constant 0 : i32
    %c0_i32_0 = arith.constant 0 : i32
    %c0_i32_1 = arith.constant 0 : i32
    return %c0_i32, %c0_i32_0 : i32, i32
  }
  func.func @transform_4(%arg0: i32) -> (i32, i32, i32) {
    %c0_i32 = arith.constant 0 : i32
    %c0_i32_0 = arith.constant 0 : i32
    %c0_i32_1 = arith.constant 0 : i32
    return %arg0, %c0_i32, %c0_i32_0 : i32, i32, i32
  }
  func.func @transform_5(%arg0: i32) -> (i32, i32) {
    %c0_i32 = arith.constant 0 : i32
    %c0_i32_0 = arith.constant 0 : i32
    %c0_i32_1 = arith.constant 0 : i32
    return %c0_i32, %c0_i32_0 : i32, i32
  }
}

</mosaic_0001>

<llo_original>
// kernel: encoder_rnn_forward.1
$region0: #{encoder_rnn_forward.1}
  #allocation0 [shape = 'u32[]', space=smem, size = 0x4, offset = 0x4, fixed_abs, tag = 'smem constant byte address 0x4 - core index']
  #allocation1 [shape = 'u32[144,128]{1,0:T(1,128)}', space=vmem, size = 0x12000, scoped, tag = 'internal scratch']
  %s0 = inlined_call_operand.vmem [shape: f32[8,8,384], index: 0, kind: input, shape index: {}]
  %s1 = inlined_call_operand.vmem [shape: f32[8,128], index: 1, kind: input, shape index: {}]
  %s2 = inlined_call_operand.vmem [shape: f32[128,384], index: 2, kind: input, shape index: {}]
  %s3 = inlined_call_operand.vmem [shape: f32[1,128], index: 3, kind: input, shape index: {}]
  %s4 = inlined_call_operand.vmem [shape: f32[8,8,128], index: 4, kind: output, shape index: {0}]
  %s5 = inlined_call_operand.vmem [shape: f32[8,128], index: 5, kind: output, shape index: {1}]
  %6 = xla_tuple %s4, %s5
  %s7 = sld [smem:[#allocation0]]
  $region45: #{encoder_rnn_forward.1} parent=0
    _
  %s9 = ssub.s32 1, %s7
  %s10 = scalar_select 0, %s9, %s7
  // Predicated region
  $region2: #{encoder_rnn_forward.1} parent=0 // pred_check
    _
  $region3: #{encoder_rnn_forward.1} parent=0 // pred_check_branch
    %12 = sbr.rel (0) target = $region5
  $region4: #{encoder_rnn_forward.1} parent=0 // pred_region
    _
  $region5: #{encoder_rnn_forward.1} parent=0 // pred_fallthru
    _
  // Predicated region
  $region6: #{encoder_rnn_forward.1} parent=0 // pred_check
    _
  $region7: #{encoder_rnn_forward.1} parent=0 // pred_check_branch
    %14 = sbr.rel (0) target = $region9
  $region8: #{encoder_rnn_forward.1} parent=0 // pred_region
    _
  $region9: #{encoder_rnn_forward.1} parent=0 // pred_fallthru
    _
  // Predicated region
  $region10: #{encoder_rnn_forward.1} parent=0 // pred_check
    _
  $region11: #{encoder_rnn_forward.1} parent=0 // pred_check_branch
    %16 = sbr.rel (0) target = $region13
  $region12: #{encoder_rnn_forward.1} parent=0 // pred_region
    _
  $region13: #{encoder_rnn_forward.1} parent=0 // pred_fallthru
    _
  // Predicated region
  $region14: #{encoder_rnn_forward.1} parent=0 // pred_check
    _
  $region15: #{encoder_rnn_forward.1} parent=0 // pred_check_branch
    %18 = sbr.rel (0) target = $region17
  $region16: #{encoder_rnn_forward.1} parent=0 // pred_region
    _
  $region17: #{encoder_rnn_forward.1} parent=0 // pred_fallthru
    _
  %p19 = scmp.eq.s32.totalorder 0, 0
  // Predicated region
  $region18: #{encoder_rnn_forward.1} parent=0 // pred_check
    %p20 = pneg %p19
  $region19: #{encoder_rnn_forward.1} parent=0 // pred_check_branch
    %22 = sbr.rel (%p20) target = $region21
  $region20: #{encoder_rnn_forward.1} parent=0 // pred_region
    %v23 = vld [vmem:[%s1] sm:$0xff]
    %24 = vst [vmem:[%s5] sm:$0xff] %v23
  $region21: #{encoder_rnn_forward.1} parent=0 // pred_fallthru
    _
  %v25 = vld [vmem:[%s2] sm:$0xff]
  %v26 = vld [vmem:[%s2 + $0x8] sm:$0xff]
  %v27 = vld [vmem:[%s2 + $0x10] sm:$0xff]
  %v28 = vld [vmem:[%s2 + $0x18] sm:$0xff]
  %v29 = vld [vmem:[%s2 + $0x20] sm:$0xff]
  %v30 = vld [vmem:[%s2 + $0x28] sm:$0xff]
  %v31 = vld [vmem:[%s2 + $0x30] sm:$0xff]
  %v32 = vld [vmem:[%s2 + $0x38] sm:$0xff]
  %v33 = vld [vmem:[%s2 + $0x40] sm:$0xff]
  %v34 = vld [vmem:[%s2 + $0x48] sm:$0xff]
  %v35 = vld [vmem:[%s2 + $0x50] sm:$0xff]
  %v36 = vld [vmem:[%s2 + $0x58] sm:$0xff]
  %v37 = vld [vmem:[%s2 + $0x60] sm:$0xff]
  %v38 = vld [vmem:[%s2 + $0x68] sm:$0xff]
  %v39 = vld [vmem:[%s2 + $0x70] sm:$0xff]
  %v40 = vld [vmem:[%s2 + $0x78] sm:$0xff]
  %v41 = vld [vmem:[%s2 + $0x80] sm:$0xff]
  %v42 = vld [vmem:[%s2 + $0x88] sm:$0xff]
  %v43 = vld [vmem:[%s2 + $0x90] sm:$0xff]
  %v44 = vld [vmem:[%s2 + $0x98] sm:$0xff]
  %v45 = vld [vmem:[%s2 + $0xa0] sm:$0xff]
  %v46 = vld [vmem:[%s2 + $0xa8] sm:$0xff]
  %v47 = vld [vmem:[%s2 + $0xb0] sm:$0xff]
  %v48 = vld [vmem:[%s2 + $0xb8] sm:$0xff]
  %v49 = vld [vmem:[%s2 + $0xc0] sm:$0xff]
  %v50 = vld [vmem:[%s2 + $0xc8] sm:$0xff]
  %v51 = vld [vmem:[%s2 + $0xd0] sm:$0xff]
  %v52 = vld [vmem:[%s2 + $0xd8] sm:$0xff]
  %v53 = vld [vmem:[%s2 + $0xe0] sm:$0xff]
  %v54 = vld [vmem:[%s2 + $0xe8] sm:$0xff]
  %v55 = vld [vmem:[%s2 + $0xf0] sm:$0xff]
  %v56 = vld [vmem:[%s2 + $0xf8] sm:$0xff]
  %v57 = vld [vmem:[%s2 + $0x100] sm:$0xff]
  %v58 = vld [vmem:[%s2 + $0x108] sm:$0xff]
  %v59 = vld [vmem:[%s2 + $0x110] sm:$0xff]
  %v60 = vld [vmem:[%s2 + $0x118] sm:$0xff]
  %v61 = vld [vmem:[%s2 + $0x120] sm:$0xff]
  %v62 = vld [vmem:[%s2 + $0x128] sm:$0xff]
  %v63 = vld [vmem:[%s2 + $0x130] sm:$0xff]
  %v64 = vld [vmem:[%s2 + $0x138] sm:$0xff]
  %v65 = vld [vmem:[%s2 + $0x140] sm:$0xff]
  %v66 = vld [vmem:[%s2 + $0x148] sm:$0xff]
  %v67 = vld [vmem:[%s2 + $0x150] sm:$0xff]
  %v68 = vld [vmem:[%s2 + $0x158] sm:$0xff]
  %v69 = vld [vmem:[%s2 + $0x160] sm:$0xff]
  %v70 = vld [vmem:[%s2 + $0x168] sm:$0xff]
  %v71 = vld [vmem:[%s2 + $0x170] sm:$0xff]
  %v72 = vld [vmem:[%s2 + $0x178] sm:$0xff]
  %v73 = vld [vmem:[%s3] sm:$0x1]
  %s74 = smul.u32 0, 8
  %s75 = ssub.s32 8, %s74
  %p76 = scmp.lt.s32.totalorder %s75, 8
  %s77 = scalar_select %p76, %s75, 8
  %v78 = vld [vmem:[%s5] sm:$0xff]
  // While loop
  $region22: #{encoder_rnn_forward.1} parent=0 // loop_pre_header
    _
  $region23: #{encoder_rnn_forward.1} parent=0 // loop_header
    %s80 = sphi 0, %s82
    %p81 = scmp.ge.s32.totalorder %s80, %s77
    %v85 = vphi %v78, %v260
  $region24: #{encoder_rnn_forward.1} parent=0 // loop_header_branch
    %84 = sbr.rel (%p81) target = $region28
  $region25: #{encoder_rnn_forward.1} parent=0 // loop_body
    %s86 = smul.u32 %s80, 3
    %s87 = smul.addr %s86, 8
    %s88 = scalar_lea.vmem %s0, %s87
    %v89 = vld [vmem:[%s88] sm:$0xff]
    %v90 = vld [vmem:[%s88 + $0x8] sm:$0xff]
    %v91 = vld [vmem:[%s88 + $0x10] sm:$0xff]
    %92 = vmatprep.subr.mxu0 %v26
    %93 = vmatpush1.msra.mxu0 %v25
    %94 = vmatprep.subr.mxu0 %v29
    %95 = vmatpush1.msra.mxu0 %v28
    %96 = vmatprep.subr.mxu0 %v32
    %97 = vmatpush1.msra.mxu0 %v31
    %98 = vmatprep.subr.mxu0 %v35
    %99 = vmatpush1.msra.mxu0 %v34
    %100 = vmatprep.subr.mxu0 %v38
    %101 = vmatpush1.msra.mxu0 %v37
    %102 = vmatprep.subr.mxu0 %v41
    %103 = vmatpush1.msra.mxu0 %v40
    %104 = vmatprep.subr.mxu0 %v44
    %105 = vmatpush1.msra.mxu0 %v43
    %106 = vmatprep.subr.mxu0 %v47
    %107 = vmatpush1.msra.mxu0 %v46
    %108 = vmatprep.subr.mxu0 %v50
    %109 = vmatpush1.msra.mxu0 %v49
    %110 = vmatprep.subr.mxu0 %v53
    %111 = vmatpush1.msra.mxu0 %v52
    %112 = vmatprep.subr.mxu0 %v56
    %113 = vmatpush1.msra.mxu0 %v55
    %114 = vmatprep.subr.mxu0 %v59
    %115 = vmatpush1.msra.mxu0 %v58
    %116 = vmatprep.subr.mxu0 %v62
    %117 = vmatpush1.msra.mxu0 %v61
    %118 = vmatprep.subr.mxu0 %v65
    %119 = vmatpush1.msra.mxu0 %v64
    %120 = vmatprep.subr.mxu0 %v68
    %121 = vmatpush1.msra.mxu0 %v67
    %122 = vmatprep.subr.mxu0 %v71
    %123 = vmatpush1.msra.mxu0 %v70
    %124 = vmatprep.subr.mxu0 0.0
    %125 = vmatpush1.msra.mxu0 0.0
    %126 = vmatprep.subr.mxu0 0.0
    %127 = vmatpush1.msra.mxu0 0.0
    %128 = vmatprep.subr.mxu0 0.0
    %129 = vmatpush1.msra.mxu0 0.0
    %130 = vmatprep.subr.mxu0 0.0
    %131 = vmatpush1.msra.mxu0 0.0
    %132 = vmatprep.subr.mxu0 0.0
    %133 = vmatpush1.msra.mxu0 0.0
    %134 = vmatprep.subr.mxu0 0.0
    %135 = vmatpush1.msra.mxu0 0.0
    %136 = vmatprep.subr.mxu0 0.0
    %137 = vmatpush1.msra.mxu0 0.0
    %138 = vmatprep.subr.mxu0 0.0
    %139 = vmatpush1.msra.mxu0 0.0
    %140 = vmatprep.subr.mxu0 0.0
    %141 = vmatpush1.msra.mxu0 0.0
    %142 = vmatprep.subr.mxu0 0.0
    %143 = vmatpush1.msra.mxu0 0.0
    %144 = vmatprep.subr.mxu0 0.0
    %145 = vmatpush1.msra.mxu0 0.0
    %146 = vmatprep.subr.mxu0 0.0
    %147 = vmatpush1.msra.mxu0 0.0
    %148 = vmatprep.subr.mxu0 0.0
    %149 = vmatpush1.msra.mxu0 0.0
    %150 = vmatprep.subr.mxu0 0.0
    %151 = vmatpush1.msra.mxu0 0.0
    %152 = vmatprep.subr.mxu0 0.0
    %153 = vmatpush1.msra.mxu0 0.0
    %154 = vmatprep.subr.mxu0 0.0
    %155 = vmatpush1.msra.mxu0 0.0
    %156 = vmatprep.mubr.f32.mxu0 0.0
    %157 = vmatmul.mubr.f32.gmra.mrb[0].mxu0 %v85
    %v158 = vpop.f32.mrb[0].mxu0
    %v159 = vadd.f32 0.0, %v158
    %v160 = vpop.f32.mrb[0].mxu0
    %v161 = vadd.f32 0.0, %v160
    %162 = vdwg.mxu0
    %163 = vmatprep.subr.mxu0 0.0
    %164 = vmatpush1.msra.mxu0 %v27
    %165 = vmatprep.subr.mxu0 0.0
    %166 = vmatpush1.msra.mxu0 %v30
    %167 = vmatprep.subr.mxu0 0.0
    %168 = vmatpush1.msra.mxu0 %v33
    %169 = vmatprep.subr.mxu0 0.0
    %170 = vmatpush1.msra.mxu0 %v36
    %171 = vmatprep.subr.mxu0 0.0
    %172 = vmatpush1.msra.mxu0 %v39
    %173 = vmatprep.subr.mxu0 0.0
    %174 = vmatpush1.msra.mxu0 %v42
    %175 = vmatprep.subr.mxu0 0.0
    %176 = vmatpush1.msra.mxu0 %v45
    %177 = vmatprep.subr.mxu0 0.0
    %178 = vmatpush1.msra.mxu0 %v48
    %179 = vmatprep.subr.mxu0 0.0
    %180 = vmatpush1.msra.mxu0 %v51
    %181 = vmatprep.subr.mxu0 0.0
    %182 = vmatpush1.msra.mxu0 %v54
    %183 = vmatprep.subr.mxu0 0.0
    %184 = vmatpush1.msra.mxu0 %v57
    %185 = vmatprep.subr.mxu0 0.0
    %186 = vmatpush1.msra.mxu0 %v60
    %187 = vmatprep.subr.mxu0 0.0
    %188 = vmatpush1.msra.mxu0 %v63
    %189 = vmatprep.subr.mxu0 0.0
    %190 = vmatpush1.msra.mxu0 %v66
    %191 = vmatprep.subr.mxu0 0.0
    %192 = vmatpush1.msra.mxu0 %v69
    %193 = vmatprep.subr.mxu0 0.0
    %194 = vmatpush1.msra.mxu0 %v72
    %195 = vmatprep.subr.mxu0 0.0
    %196 = vmatpush1.msra.mxu0 0.0
    %197 = vmatprep.subr.mxu0 0.0
    %198 = vmatpush1.msra.mxu0 0.0
    %199 = vmatprep.subr.mxu0 0.0
    %200 = vmatpush1.msra.mxu0 0.0
    %201 = vmatprep.subr.mxu0 0.0
    %202 = vmatpush1.msra.mxu0 0.0
    %203 = vmatprep.subr.mxu0 0.0
    %204 = vmatpush1.msra.mxu0 0.0
    %205 = vmatprep.subr.mxu0 0.0
    %206 = vmatpush1.msra.mxu0 0.0
    %207 = vmatprep.subr.mxu0 0.0
    %208 = vmatpush1.msra.mxu0 0.0
    %209 = vmatprep.subr.mxu0 0.0
    %210 = vmatpush1.msra.mxu0 0.0
    %211 = vmatprep.subr.mxu0 0.0
    %212 = vmatpush1.msra.mxu0 0.0
    %213 = vmatprep.subr.mxu0 0.0
    %214 = vmatpush1.msra.mxu0 0.0
    %215 = vmatprep.subr.mxu0 0.0
    %216 = vmatpush1.msra.mxu0 0.0
    %217 = vmatprep.subr.mxu0 0.0
    %218 = vmatpush1.msra.mxu0 0.0
    %219 = vmatprep.subr.mxu0 0.0
    %220 = vmatpush1.msra.mxu0 0.0
    %221 = vmatprep.subr.mxu0 0.0
    %222 = vmatpush1.msra.mxu0 0.0
    %223 = vmatprep.subr.mxu0 0.0
    %224 = vmatpush1.msra.mxu0 0.0
    %225 = vmatprep.subr.mxu0 0.0
    %226 = vmatpush1.msra.mxu0 0.0
    %227 = vmatprep.mubr.f32.mxu0 0.0
    %228 = vmatmul.mubr.f32.gmra.mrb[0].mxu0 %v85
    %v229 = vpop.f32.mrb[0].mxu0
    %v230 = vadd.f32 0.0, %v229
    %v231 = vpop.f32.mrb[0].mxu0
    %232 = vdwg.mxu0
    %v233 = vadd.f32 %v89, %v159
    %v234 = vxor.u32 %v233, 2147483648
    %v235 = vmul.f32 %v234, 1.442695
    %v236 = vpow.pop %v235
    %v237 = vadd.f32 %v236, 1.0
    %v238 = vrcp.pop %v237
    %v239 = vmul.f32 1.0, %v238
    %v240 = vadd.f32 %v90, %v161
    %v241 = vxor.u32 %v240, 2147483648
    %v242 = vmul.f32 %v241, 1.442695
    %v243 = vpow.pop %v242
    %v244 = vadd.f32 %v243, 1.0
    %v245 = vrcp.pop %v244
    %v246 = vmul.f32 1.0, %v245
    %v248 = vlaneseq
    %v249 = vshrl.u32 %v248, 7
    %v250 = vsub.s32 0, %v249
    %v251 = vrot.slane %v73, %v250
    %v253 = vadd.f32 %v230, %v251
    %v254 = vmul.f32 %v239, %v253
    %v255 = vadd.f32 %v91, %v254
    %v256 = vtanh.pop %v255
    %v257 = vsub.f32 1.0, %v246
    %v258 = vmul.f32 %v257, %v256
    %v259 = vmul.f32 %v246, %v85
    %v260 = vadd.f32 %v258, %v259
    %s261 = smul.u32 %s80, 8
    %s262 = scalar_lea.vmem %s4, %s261
    %263 = vst [vmem:[%s262] sm:$0xff] %v260
  $region26: #{encoder_rnn_forward.1} parent=0 // loop_footer
    %s82 = sadd.s32 %s80, 1
  $region27: #{encoder_rnn_forward.1} parent=0 // loop_footer_branch
    %79 = sbr.rel target = $region23
  $region28: #{encoder_rnn_forward.1} parent=0 // loop_exit
    _
  %264 = vst [vmem:[%s5] sm:$0xff] %v85
  // Predicated region
  $region29: #{encoder_rnn_forward.1} parent=0 // pred_check
    _
  $region30: #{encoder_rnn_forward.1} parent=0 // pred_check_branch
    %266 = sbr.rel (0) target = $region32
  $region31: #{encoder_rnn_forward.1} parent=0 // pred_region
    _
  $region32: #{encoder_rnn_forward.1} parent=0 // pred_fallthru
    _
  // Predicated region
  $region33: #{encoder_rnn_forward.1} parent=0 // pred_check
    _
  $region34: #{encoder_rnn_forward.1} parent=0 // pred_check_branch
    %268 = sbr.rel (0) target = $region36
  $region35: #{encoder_rnn_forward.1} parent=0 // pred_region
    _
  $region36: #{encoder_rnn_forward.1} parent=0 // pred_fallthru
    _
  // Predicated region
  $region37: #{encoder_rnn_forward.1} parent=0 // pred_check
    _
  $region38: #{encoder_rnn_forward.1} parent=0 // pred_check_branch
    %270 = sbr.rel (0) target = $region40
  $region39: #{encoder_rnn_forward.1} parent=0 // pred_region
    _
  $region40: #{encoder_rnn_forward.1} parent=0 // pred_fallthru
    _
  // Predicated region
  $region41: #{encoder_rnn_forward.1} parent=0 // pred_check
    _
  $region42: #{encoder_rnn_forward.1} parent=0 // pred_check_branch
    %272 = sbr.rel (0) target = $region44
  $region43: #{encoder_rnn_forward.1} parent=0 // pred_region
    _
  $region44: #{encoder_rnn_forward.1} parent=0 // pred_fallthru
    _

</llo_original>
